<compile_context>
chip_gen: v5e
topology: v5e:2x2
jax: 0.10.0
libtpu: 0.0.40
codegen_flags: <defaults>
</compile_context>

<pallas_src>
import functools

import jax
import jax.numpy as jnp
from jax.experimental import pallas as pl
from jax.experimental.pallas import tpu as pltpu


def _round_up(x, m):
    return ((x + m - 1) // m) * m


def _kd_row_kl_kernel(x_ref, t_ref, o_ref, *, inv_temp: float,
                      use_mxu_sums: bool):
    """Per-row KL(q || p) for one (TB, C) block of student/teacher logits."""
    x_raw = x_ref[...]            # student logits, HBM dtype (bf16 stays bf16)
    y_raw = t_ref[...]            # teacher logits, HBM dtype

    # Row max on the raw logits; temperature applied AFTER the shift
    # (exact since inv_temp > 0).  Class axis is the last / lane axis.
    x_max = jnp.max(x_raw, axis=-1, keepdims=True).astype(jnp.float32)
    y_max = jnp.max(y_raw, axis=-1, keepdims=True).astype(jnp.float32)

    x_sh = (x_raw.astype(jnp.float32) - x_max) * inv_temp
    y_sh = (y_raw.astype(jnp.float32) - y_max) * inv_temp
    x_exp = jnp.exp(x_sh)
    y_exp = jnp.exp(y_sh)
    prod = y_exp * (y_sh - x_sh)

    if use_mxu_sums:
        # Offload the three class-axis accumulations to the idle MXU.
        ones = jnp.ones((x_raw.shape[-1], 1), jnp.float32)
        x_sum = jnp.dot(x_exp, ones, preferred_element_type=jnp.float32)
        y_sum = jnp.dot(y_exp, ones, preferred_element_type=jnp.float32)
        s = jnp.dot(prod, ones, preferred_element_type=jnp.float32)
    else:
        # Tiny C: plain VPU/XLU reductions.
        x_sum = jnp.sum(x_exp, axis=-1, keepdims=True)
        y_sum = jnp.sum(y_exp, axis=-1, keepdims=True)
        s = jnp.sum(prod, axis=-1, keepdims=True)

    # Per-row KL(q || p), using sum_j q_j == 1:
    #   sum_j q_j*(log q_j - log p_j)
    #     = (1/y_sum) * sum_j y_exp_j*(y_sh_j - x_sh_j) - log(y_sum) + log(x_sum)
    o_ref[...] = s / y_sum - jnp.log(y_sum) + jnp.log(x_sum)


def kd_loss(inp, target, temp_factor, *, block_rows=None):
    """KDLoss.forward(input, target) -> scalar f32 loss."""
    assert inp.ndim == 2 and inp.shape == target.shape
    assert isinstance(temp_factor, (int, float)), (
        "temp_factor must be a static Python scalar (it is baked into the "
        "kernel as 1/T)")
    b, c = inp.shape
    inv_temp = 1.0 / float(temp_factor)
    in_bytes = (jnp.dtype(inp.dtype).itemsize
                + jnp.dtype(target.dtype).itemsize)

    # Generation-aware budgets: v5e/v6e have 128 MiB VMEM, v7x has 64 MiB.
    try:
        vmem_cap = int(pltpu.get_tpu_info().vmem_capacity_bytes)
    except Exception:
        vmem_cap = 64 * 1024 * 1024
    big_vmem = vmem_cap >= 100 * 1024 * 1024

    if block_rows is None:
        budget = (24 if big_vmem else 12) * 1024 * 1024
        # Honest per-row footprint: 2x double-buffered raw input streams plus
        # ~6 full-width f32 intermediates (x_sh, y_sh, x_exp, y_exp, prod, slack).
        per_row = c * (2 * in_bytes + 6 * 4)
        block_rows = max(budget // per_row, 8)

    # Cap TB so the grid has >= 2 steps whenever B allows it (v7x: 2 TCs/chip).
    half_b = _round_up(-(-b // 2), 16)
    tb = min(int(block_rows), half_b, b)
    if tb < b:
        tb = max((tb // 16) * 16, 8)          # sublane / bf16-pack friendly
    tb = max(min(tb, b), 1)

    num_blocks = pl.cdiv(b, tb)
    kernel = functools.partial(_kd_row_kl_kernel, inv_temp=inv_temp,
                               use_mxu_sums=(c >= 128))

    cost = pl.CostEstimate(
        flops=11 * b * c,                 # ~elementwise + reduction work
        transcendentals=2 * b * c,        # two exps per element pair
        bytes_accessed=b * c * in_bytes + b * 4,
    )

    kl_rows = pl.pallas_call(
        kernel,
        out_shape=jax.ShapeDtypeStruct((b, 1), jnp.float32),
        grid=(num_blocks,),
        in_specs=[
            pl.BlockSpec((tb, c), lambda i: (i, 0)),
            pl.BlockSpec((tb, c), lambda i: (i, 0)),
        ],
        out_specs=pl.BlockSpec((tb, 1), lambda i: (i, 0)),
        compiler_params=pltpu.CompilerParams(
            dimension_semantics=("parallel",),
            vmem_limit_bytes=(64 if big_vmem else 32) * 1024 * 1024,
        ),
        cost_estimate=cost,
    )(inp, target)

    # Tiny final reduction + KD scaling (T^2 / batch) in plain JAX.
    return jnp.sum(kl_rows) * (float(temp_factor) ** 2 / b)


def _kd_loss_ref(inp, target, temp_factor):
    # Pure-JAX reference matching the PyTorch module.
    log_p = jax.nn.log_softmax(inp / temp_factor, axis=1)
    q = jax.nn.softmax(target / temp_factor, axis=1)
    log_q = jax.nn.log_softmax(target / temp_factor, axis=1)
    kl = jnp.sum(q * (log_q - log_p))
    return kl * temp_factor ** 2 / inp.shape[0]


if __name__ == "__main__":
    temp_factor = 4.0
    key = jax.random.PRNGKey(0)
    k1, k2, k3, k4 = jax.random.split(key, 4)

    # Case 1: small f32 logits, single block, VPU-sum path (B=8, C=32).
    B1, C1 = 8, 32
    s1 = jax.random.normal(k1, (B1, C1), jnp.float32) * 2.0
    t1 = jax.random.normal(k2, (B1, C1), jnp.float32) * 2.0
    loss1 = jax.block_until_ready(kd_loss(s1, t1, temp_factor))
    ref1 = _kd_loss_ref(s1, t1, temp_factor)
    assert jnp.allclose(loss1, ref1, rtol=1e-4, atol=1e-5), (loss1, ref1)

    # Case 2: bf16 logits, multi-block grid with a partial edge block and the
    # MXU-sum path (B=40 rows, TB=16 -> 3 grid steps, last block 8 valid rows).
    B2, C2 = 40, 256
    s2 = (jax.random.normal(k3, (B2, C2), jnp.float32) * 3.0).astype(jnp.bfloat16)
    t2 = (jax.random.normal(k4, (B2, C2), jnp.float32) * 3.0).astype(jnp.bfloat16)
    ref2 = _kd_loss_ref(s2.astype(jnp.float32), t2.astype(jnp.float32),
                        temp_factor)

    loss2 = jax.block_until_ready(kd_loss(s2, t2, temp_factor, block_rows=16))
    assert jnp.allclose(loss2, ref2, rtol=1e-3, atol=1e-4), (loss2, ref2)

    # Case 2b: same inputs through the default TB heuristic (2-step grid).
    loss2b = jax.block_until_ready(kd_loss(s2, t2, temp_factor))
    assert jnp.allclose(loss2b, ref2, rtol=1e-3, atol=1e-4), (loss2b, ref2)

    print("KERNEL_OK")
</pallas_src>

<mosaic_0001>
module attributes {stable_mosaic.version = 11 : i64} {
  func.func @_kd_row_kl_kernel(%arg0: i32, %arg1: memref<8x32xf32, #tpu.memory_space<vmem>>, %arg2: memref<8x32xf32, #tpu.memory_space<vmem>>, %arg3: memref<8x1xf32, #tpu.memory_space<vmem>>) attributes {dimension_semantics = [#tpu.dimension_semantics<parallel>], iteration_bounds = array<i64: 1>, scalar_prefetch = 0 : i64, scratch_operands = 0 : i64, tpu.core_type = #tpu.core_type<tc>, window_params = [{transform_indices = @transform_0, window_bounds = array<i64: 8, 32>}, {transform_indices = @transform_1, window_bounds = array<i64: 8, 32>}, {transform_indices = @transform_2, window_bounds = array<i64: 8, 1>}]} {
    %c0 = arith.constant 0 : index
    %c0_0 = arith.constant 0 : index
    %0 = vector.load %arg1[%c0, %c0_0] : memref<8x32xf32, #tpu.memory_space<vmem>>, vector<8x32xf32>
    %c0_1 = arith.constant 0 : index
    %c0_2 = arith.constant 0 : index
    %1 = vector.load %arg2[%c0_1, %c0_2] : memref<8x32xf32, #tpu.memory_space<vmem>>, vector<8x32xf32>
    %cst = arith.constant dense<0xFF800000> : vector<8xf32>
    %2 = vector.multi_reduction <maximumf>, %0, %cst [1] : vector<8x32xf32> to vector<8xf32>
    %3 = vector.shape_cast %2 : vector<8xf32> to vector<8x1xf32>
    %cst_3 = arith.constant dense<0xFF800000> : vector<8xf32>
    %4 = vector.multi_reduction <maximumf>, %1, %cst_3 [1] : vector<8x32xf32> to vector<8xf32>
    %5 = vector.shape_cast %4 : vector<8xf32> to vector<8x1xf32>
    %6 = vector.broadcast %3 : vector<8x1xf32> to vector<8x32xf32>
    %7 = arith.subf %0, %6 : vector<8x32xf32>
    %cst_4 = arith.constant 2.500000e-01 : f32
    %8 = vector.broadcast %cst_4 : f32 to vector<8x32xf32>
    %9 = arith.mulf %7, %8 : vector<8x32xf32>
    %10 = vector.broadcast %5 : vector<8x1xf32> to vector<8x32xf32>
    %11 = arith.subf %1, %10 : vector<8x32xf32>
    %cst_5 = arith.constant 2.500000e-01 : f32
    %12 = vector.broadcast %cst_5 : f32 to vector<8x32xf32>
    %13 = arith.mulf %11, %12 : vector<8x32xf32>
    %14 = math.exp %9 : vector<8x32xf32>
    %15 = math.exp %13 : vector<8x32xf32>
    %16 = arith.subf %13, %9 : vector<8x32xf32>
    %17 = arith.mulf %15, %16 : vector<8x32xf32>
    %cst_6 = arith.constant dense<0.000000e+00> : vector<8xf32>
    %18 = vector.multi_reduction <add>, %14, %cst_6 [1] : vector<8x32xf32> to vector<8xf32>
    %19 = vector.shape_cast %18 : vector<8xf32> to vector<8x1xf32>
    %cst_7 = arith.constant dense<0.000000e+00> : vector<8xf32>
    %20 = vector.multi_reduction <add>, %15, %cst_7 [1] : vector<8x32xf32> to vector<8xf32>
    %21 = vector.shape_cast %20 : vector<8xf32> to vector<8x1xf32>
    %cst_8 = arith.constant dense<0.000000e+00> : vector<8xf32>
    %22 = vector.multi_reduction <add>, %17, %cst_8 [1] : vector<8x32xf32> to vector<8xf32>
    %23 = vector.shape_cast %22 : vector<8xf32> to vector<8x1xf32>
    %24 = arith.divf %23, %21 : vector<8x1xf32>
    %25 = math.log %21 : vector<8x1xf32>
    %26 = arith.subf %24, %25 : vector<8x1xf32>
    %27 = math.log %19 : vector<8x1xf32>
    %28 = arith.addf %26, %27 : vector<8x1xf32>
    %c0_9 = arith.constant 0 : index
    %c0_10 = arith.constant 0 : index
    %29 = vector.load %arg3[%c0_9, %c0_10] : memref<8x1xf32, #tpu.memory_space<vmem>>, vector<8x1xf32>
    tpu.vector_store %arg3[%c0_9, %c0_10], %28 {strides = array<i32>} : memref<8x1xf32, #tpu.memory_space<vmem>>, vector<8x1xf32>,
    return
  }
  func.func @transform_0(%arg0: i32) -> (i32, i32) {
    %c0_i32 = arith.constant 0 : i32
    %c0_i32_0 = arith.constant 0 : i32
    return %arg0, %c0_i32 : i32, i32
  }
  func.func @transform_1(%arg0: i32) -> (i32, i32) {
    %c0_i32 = arith.constant 0 : i32
    %c0_i32_0 = arith.constant 0 : i32
    return %arg0, %c0_i32 : i32, i32
  }
  func.func @transform_2(%arg0: i32) -> (i32, i32) {
    %c0_i32 = arith.constant 0 : i32
    %c0_i32_0 = arith.constant 0 : i32
    return %arg0, %c0_i32 : i32, i32
  }
}

</mosaic_0001>

<llo_original>
// kernel: tpu_custom_call.1
$region0: #{tpu_custom_call.1}
  #allocation0 [shape = 'u32[]', space=smem, size = 0x4, offset = 0x4, fixed_abs, tag = 'smem constant byte address 0x4 - core index']
  #allocation1 [shape = 'u32[72,128]{1,0:T(1,128)}', space=vmem, size = 0x9000, scoped, tag = 'internal scratch']
  %s0 = inlined_call_operand.hbm [shape: f32[8,32], index: 0, kind: input, shape index: {}]
  %s1 = inlined_call_operand.hbm [shape: f32[8,32], index: 1, kind: input, shape index: {}]
  %s2 = inlined_call_operand.vmem [shape: f32[8,1], index: 2, kind: output, shape index: {}]
  %s3 = sld [smem:[#allocation0]]
  $region26: #{tpu_custom_call.1} parent=0
    _
  %s5 = ssub.s32 1, %s3
  %s6 = scalar_select 0, %s5, %s3
  $region1: #{tpu_custom_call.1} parent=0
    #allocation2 [shape = 'u8[4096]{0}', space=vmem, size = 0x1000, scoped, tag = 'input window, operand 0, single buffered']
    #allocation3 [shape = 's32[1]{0}', space=sflag, size = 0x4, scoped, tag = 'scoped memory for tpu_custom_call.1']
    #allocation4 [shape = 'u8[4096]{0}', space=vmem, size = 0x1000, scoped, tag = 'input window, operand 1, single buffered']
    #allocation5 [shape = 's32[1]{0}', space=sflag, size = 0x4, scoped, tag = 'scoped memory for tpu_custom_call.1']
    %7 = vsyncpa [#allocation3], 0
    %8 = vsyncpa [#allocation5], 0
    // Predicated region
    $region2: #{tpu_custom_call.1} parent=1 // pred_check
      _
    $region3: #{tpu_custom_call.1} parent=1 // pred_check_branch
      %10 = sbr.rel (0) target = $region5
    $region4: #{tpu_custom_call.1} parent=1 // pred_region
      %12 = vsyncadd [#allocation3], 0
      %s14 = sshll.u32 %s0, 4
      %s15 = int_to_ptr.hbm [resolvable:$true] %s14
      %s16 = sshll.u32 [#allocation2], 4
      %s17 = int_to_ptr.vmem [resolvable:$true] %s16
      %19 = dma.hbm_to_vmem [thread:$0]  %s15, 128, %s17, [#allocation3]
    $region5: #{tpu_custom_call.1} parent=1 // pred_fallthru
      _
    // Predicated region
    $region6: #{tpu_custom_call.1} parent=1 // pred_check
      _
    $region7: #{tpu_custom_call.1} parent=1 // pred_check_branch
      %21 = sbr.rel (0) target = $region9
    $region8: #{tpu_custom_call.1} parent=1 // pred_region
      %23 = vsyncadd [#allocation5], 0
      %s25 = sshll.u32 %s1, 4
      %s26 = int_to_ptr.hbm [resolvable:$true] %s25
      %s27 = sshll.u32 [#allocation4], 4
      %s28 = int_to_ptr.vmem [resolvable:$true] %s27
      %30 = dma.hbm_to_vmem [thread:$0]  %s26, 128, %s28, [#allocation5]
    $region9: #{tpu_custom_call.1} parent=1 // pred_fallthru
      _
    // Predicated region
    $region10: #{tpu_custom_call.1} parent=1 // pred_check
      _
    $region11: #{tpu_custom_call.1} parent=1 // pred_check_branch
      %32 = sbr.rel (0) target = $region13
    $region12: #{tpu_custom_call.1} parent=1 // pred_region
      %34 = dma.done [#allocation3], 128
    $region13: #{tpu_custom_call.1} parent=1 // pred_fallthru
      _
    // Predicated region
    $region14: #{tpu_custom_call.1} parent=1 // pred_check
      _
    $region15: #{tpu_custom_call.1} parent=1 // pred_check_branch
      %36 = sbr.rel (0) target = $region17
    $region16: #{tpu_custom_call.1} parent=1 // pred_region
      %38 = dma.done [#allocation5], 128
    $region17: #{tpu_custom_call.1} parent=1 // pred_fallthru
      _
    %v39 = vld [vmem:[#allocation2] sm:$0xff]
    %v40 = vld [vmem:[#allocation4] sm:$0xff]
    %vm41 = vcmask 261120
    %v42 = vsel %vm41, %v39, -inf
    %43 = vmax.xlane.f32.xlu0 %v42
    %v44 = vpop.xlane.xlu0 %43
    %v45 = vsel %vm41, %v40, -inf
    %46 = vmax.xlane.f32.xlu0 %v45
    %v47 = vpop.xlane.xlu0 %46
    %v48 = vsub.f32 %v39, %v44
    %v49 = vmul.f32 %v48, 0.25
    %v50 = vsub.f32 %v40, %v47
    %v51 = vmul.f32 %v50, 0.25
    %v52 = vmul.f32 %v49, 1.442695
    %v53 = vpow.pop %v52
    %v54 = vmul.f32 %v51, 1.442695
    %v55 = vpow.pop %v54
    %v56 = vsub.f32 %v51, %v49
    %v57 = vmul.f32 %v55, %v56
    %v58 = vsel %vm41, %v53, 0.0
    %59 = vadd.xlane.f32.xlu0 %v58
    %v60 = vpop.xlane.xlu0 %59
    %v61 = vsel %vm41, %v55, 0.0
    %62 = vadd.xlane.f32.xlu0 %v61
    %v63 = vpop.xlane.xlu0 %62
    %v64 = vsel %vm41, %v57, 0.0
    %65 = vadd.xlane.f32.xlu0 %v64
    %v66 = vpop.xlane.xlu0 %65
    %v67 = vrcp.pop %v63
    %v68 = vmul.f32 %v63, %v67
    %v69 = vsub.f32 1.0, %v68
    %v70 = vmul.f32 %v67, %v69
    %v71 = vadd.f32 %v67, %v70
    %vm72 = vweird.f32 %v63
    %vm73 = vweird.f32 %v67
    %vm74 = vmor %vm72, %vm73
    %v75 = vsel %vm74, %v67, %v71
    %v76 = vand.u32 2147483647, %v63
    %vm77 = vcmp.eq.f32.partialorder %v76, 8.507059e+37
    %v78 = vand.u32 %v63, 2147483648
    %v79 = vor.u32 1.1754944e-38, %v78
    %v80 = vsel %vm77, %v79, %v75
    %v81 = vmul.f32 %v66, %v80
    %v82 = vlog2.pop %v63
    %v83 = vmul.f32 %v82, 0.6931472
    %v84 = vsub.f32 %v81, %v83
    %v85 = vlog2.pop %v60
    %v86 = vmul.f32 %v85, 0.6931472
    %v87 = vadd.f32 %v84, %v86
    %vm88 = vcmask 7168
    %89 = vst.msk [vmem:[%s2] sm:$0xff] %vm88, %v87
    // Predicated region
    $region18: #{tpu_custom_call.1} parent=1 // pred_check
      _
    $region19: #{tpu_custom_call.1} parent=1 // pred_check_branch
      %91 = sbr.rel (0) target = $region21
    $region20: #{tpu_custom_call.1} parent=1 // pred_region
      _
    $region21: #{tpu_custom_call.1} parent=1 // pred_fallthru
      _
    // Predicated region
    $region22: #{tpu_custom_call.1} parent=1 // pred_check
      _
    $region23: #{tpu_custom_call.1} parent=1 // pred_check_branch
      %93 = sbr.rel (0) target = $region25
    $region24: #{tpu_custom_call.1} parent=1 // pred_region
      _
    $region25: #{tpu_custom_call.1} parent=1 // pred_fallthru
      _
    %94 = vsyncpa [#allocation3], 1
    %95 = vsyncpa [#allocation5], 1

</llo_original>
